<compile_context>
chip_gen: v7x
topology: tpu7x:2x2x1
jax: 0.10.0
libtpu: 0.0.40
codegen_flags: <defaults>
</compile_context>

<pallas_src>
import functools

import jax
import jax.numpy as jnp
from jax.experimental import pallas as pl
from jax.experimental.pallas import tpu as pltpu


# ----------------------------------------------------------------------------
# helpers
# ----------------------------------------------------------------------------
def _round_up(x, m):
    return (x + m - 1) // m * m


_VMEM_LIMIT = 32 * 1024 * 1024  # v7x-safe scoped VMEM budget


# ----------------------------------------------------------------------------
# Pallas kernel 1: single-shot matmul + bias (+ ReLU) for the im2col path
#   a:(Mp,K) bf16   w:(K,N) bf16 (BN folded)   bias:(1,N) f32   out bf16
# ----------------------------------------------------------------------------
def _mm_kernel(a_ref, w_ref, b_ref, o_ref, *, relu):
    out = jnp.dot(a_ref[...], w_ref[...], preferred_element_type=jnp.float32)
    out = out + b_ref[...]
    if relu:
        out = jnp.maximum(out, 0.0)
    o_ref[...] = out.astype(o_ref.dtype)


def matmul_bias_act(a, w, bias, relu=False):
    """out = act(a @ w + bias); full-K single block, (M, N) parallel grid."""
    M, K = a.shape
    Kw, N = w.shape
    assert K == Kw, (K, Kw)

    Mp = _round_up(M, 8)
    tm = Mp
    if Mp >= 512:
        Mp = _round_up(M, 256)
        tm = 256
    if Mp != M:
        a = jnp.pad(a, ((0, Mp - M), (0, 0)))

    tn = N // 2 if N >= 256 else N  # >=2 lane-dense parallel N blocks on v7x

    out = pl.pallas_call(
        functools.partial(_mm_kernel, relu=relu),
        out_shape=jax.ShapeDtypeStruct((Mp, N), jnp.bfloat16),
        grid=(Mp // tm, N // tn),
        in_specs=[
            pl.BlockSpec((tm, K), lambda i, n: (i, 0)),
            pl.BlockSpec((K, tn), lambda i, n: (0, n)),
            pl.BlockSpec((1, tn), lambda i, n: (0, n)),
        ],
        out_specs=pl.BlockSpec((tm, tn), lambda i, n: (i, n)),
        compiler_params=pltpu.CompilerParams(
            dimension_semantics=("parallel", "parallel"),
            vmem_limit_bytes=_VMEM_LIMIT,
        ),
    )(a, w, bias)
    return out[:M] if Mp != M else out


# ----------------------------------------------------------------------------
# Pallas kernel 2: stride-1 3x3 conv via in-kernel shifted-window matmuls.
#   x:(B, Hp*Wq, C) bf16 (padded, flattened)    w:(9, C, N) bf16 (BN folded)
#   bias:(1, N) f32      residual (optional): (B, Ho*Wq, N) bf16 (wide layout)
#   out: (B, Ho*Wq, N) bf16 ("wide" rows; columns [Wo, Wq) are cropped outside)
# ----------------------------------------------------------------------------
def _conv_s1_kernel(*refs, kh, kw, Wq, Mrows, relu, has_res):
    if has_res:
        x_ref, w_ref, b_ref, res_ref, o_ref = refs
    else:
        x_ref, w_ref, b_ref, o_ref = refs
        res_ref = None

    acc = None
    t = 0
    for i in range(kh):
        for j in range(kw):
            start = i * Wq + j
            lhs = x_ref[0, start:start + Mrows, :]          # (Mrows, C) bf16
            d = jnp.dot(lhs, w_ref[t], preferred_element_type=jnp.float32)
            acc = d if acc is None else acc + d
            t += 1

    out = acc + b_ref[...]
    if has_res:
        out = out + res_ref[0].astype(jnp.float32)
    if relu:
        out = jnp.maximum(out, 0.0)
    o_ref[0] = out.astype(o_ref.dtype)


def conv_s1_wide(x, cp, relu, residual=None):
    """3x3 / stride 1 / pad 1 conv + folded BN (+ residual) (+ ReLU), NHWC."""
    B, H, W, C = x.shape
    kh, kw = cp["kh"], cp["kw"]
    p = 1
    Wq = W + 2 * p                      # padded width (== wide output width)
    Hp = H + kh                         # top pad p, bottom pad kh - p
    Mrows = H * Wq                      # wide output rows per batch
    N = cp["w3"].shape[-1]
    tn = N // 2 if N >= 256 else N

    xp = jnp.pad(x, ((0, 0), (p, kh - p), (p, p), (0, 0)))
    xp = xp.reshape(B, Hp * Wq, C)

    args = [xp, cp["w3"], cp["b"]]
    in_specs = [
        pl.BlockSpec((1, Hp * Wq, C), lambda b, n: (b, 0, 0)),
        pl.BlockSpec((kh * kw, C, tn), lambda b, n: (0, 0, n)),
        pl.BlockSpec((1, tn), lambda b, n: (0, n)),
    ]
    has_res = residual is not None
    if has_res:
        res_w = jnp.pad(residual, ((0, 0), (0, 0), (0, Wq - W), (0, 0)))
        res_w = res_w.reshape(B, Mrows, N)
        args.append(res_w)
        in_specs.append(pl.BlockSpec((1, Mrows, tn), lambda b, n: (b, 0, n)))

    out = pl.pallas_call(
        functools.partial(_conv_s1_kernel, kh=kh, kw=kw, Wq=Wq, Mrows=Mrows,
                          relu=relu, has_res=has_res),
        out_shape=jax.ShapeDtypeStruct((B, Mrows, N), jnp.bfloat16),
        grid=(B, N // tn),
        in_specs=in_specs,
        out_specs=pl.BlockSpec((1, Mrows, tn), lambda b, n: (b, 0, n)),
        compiler_params=pltpu.CompilerParams(
            dimension_semantics=("parallel", "parallel"),
            vmem_limit_bytes=_VMEM_LIMIT,
        ),
    )(*args)

    wide = out.reshape(B, H, Wq, N)
    return wide[:, :, :W, :]            # crop the 2 garbage right columns


# ----------------------------------------------------------------------------
# Pallas kernel 3: fused transformer encoder (2 layers, S==1) + fc head
# ----------------------------------------------------------------------------
def _transformer_fc_kernel(*refs, nlayers, E, ff, eps):
    out_ref = refs[-1]
    pk = refs[-2][...]                                  # (1, P) packed f32
    wfc_ref = refs[-3]
    x = refs[0][...].astype(jnp.float32)                # (Bp, E)

    def layernorm(v, g, b):
        mu = jnp.mean(v, axis=-1, keepdims=True)
        var = jnp.mean(jnp.square(v - mu), axis=-1, keepdims=True)
        return (v - mu) * jax.lax.rsqrt(var + eps) * g + b

    per_layer = 7 * E + ff
    for l in range(nlayers):
        wv, wo, w1, w2 = refs[1 + 4 * l: 5 + 4 * l]
        o = l * per_layer
        bv = pk[:, o:o + E]; o += E
        bo = pk[:, o:o + E]; o += E
        b1 = pk[:, o:o + ff]; o += ff
        b2 = pk[:, o:o + E]; o += E
        g1 = pk[:, o:o + E]; o += E
        be1 = pk[:, o:o + E]; o += E
        g2 = pk[:, o:o + E]; o += E
        be2 = pk[:, o:o + E]; o += E

        # S == 1: softmax over a single key is 1, so attention == out_proj(V).
        v = jnp.dot(x.astype(jnp.bfloat16), wv[...],
                    preferred_element_type=jnp.float32) + bv
        attn = jnp.dot(v.astype(jnp.bfloat16), wo[...],
                       preferred_element_type=jnp.float32) + bo
        x = layernorm(x + attn, g1, be1)
        h = jnp.maximum(
            jnp.dot(x.astype(jnp.bfloat16), w1[...],
                    preferred_element_type=jnp.float32) + b1, 0.0)
        ffo = jnp.dot(h.astype(jnp.bfloat16), w2[...],
                      preferred_element_type=jnp.float32) + b2
        x = layernorm(x + ffo, g2, be2)

    bfc = pk[:, nlayers * per_layer:]
    # mean over the (length-1) seq dim is identity; lane-dense padded fc out.
    out_ref[...] = jnp.dot(x.astype(jnp.bfloat16), wfc_ref[...],
                           preferred_element_type=jnp.float32) + bfc


def transformer_fc(tp, feat):
    B, E = feat.shape
    Bp = _round_up(B, 8)
    x = feat.astype(jnp.float32)
    if Bp != B:
        x = jnp.pad(x, ((0, Bp - B), (0, 0)))

    args = [x]
    for lw in tp["layers"]:
        args += [lw["wv"], lw["wo"], lw["w1"], lw["w2"]]
    args += [tp["wfc"], tp["packed"]]
    npad = tp["wfc"].shape[1]

    out = pl.pallas_call(
        functools.partial(_transformer_fc_kernel, nlayers=len(tp["layers"]),
                          E=E, ff=tp["ff"], eps=1e-5),
        out_shape=jax.ShapeDtypeStruct((Bp, npad), jnp.float32),
        in_specs=[pl.BlockSpec(memory_space=pltpu.MemorySpace.VMEM)] * len(args),
        out_specs=pl.BlockSpec(memory_space=pltpu.MemorySpace.VMEM),
        compiler_params=pltpu.CompilerParams(vmem_limit_bytes=_VMEM_LIMIT),
    )(*args)
    return out[:B, :tp["num_classes"]]


# ----------------------------------------------------------------------------
# Conv / ResNet building blocks (NHWC, bf16 activations)
# ----------------------------------------------------------------------------
def im2col_nhwc(x, kh, kw, stride, pad):
    B, H, W, C = x.shape
    Ho = (H + 2 * pad - kh) // stride + 1
    Wo = (W + 2 * pad - kw) // stride + 1
    xp = jnp.pad(x, ((0, 0), (pad, pad), (pad, pad), (0, 0)))
    cols = []
    for i in range(kh):
        for j in range(kw):
            cols.append(xp[:, i:i + (Ho - 1) * stride + 1:stride,
                           j:j + (Wo - 1) * stride + 1:stride, :])
    col = jnp.concatenate(cols, axis=-1)          # (B, Ho, Wo, kh*kw*C)
    return col.reshape(B * Ho * Wo, kh * kw * C), Ho, Wo


def conv_im2col(x, cp, stride, pad, relu):
    """Strided conv + folded BN (+ ReLU) via im2col + single-shot matmul."""
    B = x.shape[0]
    col, Ho, Wo = im2col_nhwc(x, cp["kh"], cp["kw"], stride, pad)
    K = col.shape[1]
    Kp = cp["w"].shape[0]
    if Kp != K:                                   # only the stem (K=49 -> 56)
        col = jnp.pad(col, ((0, 0), (0, Kp - K)))
    out = matmul_bias_act(col, cp["w"], cp["b"], relu=relu)
    return out.reshape(B, Ho, Wo, -1)


def maxpool_3x3_s2_p1(x):
    # PyTorch MaxPool2d(kernel_size=3, stride=2, padding=1), NHWC, bf16.
    return jax.lax.reduce_window(
        x, jnp.array(-jnp.inf, dtype=x.dtype), jax.lax.max,
        window_dimensions=(1, 3, 3, 1),
        window_strides=(1, 2, 2, 1),
        padding=((0, 0), (1, 1), (1, 1), (0, 0)),
    )


def basic_block(x, p):
    identity = x
    s = p["stride"]
    if s == 1:
        out = conv_s1_wide(x, p["conv1"], relu=True)
    else:
        out = conv_im2col(x, p["conv1"], stride=s, pad=1, relu=True)
    if "down" in p:
        identity = conv_im2col(x, p["down"], stride=s, pad=0, relu=False)
    # conv2 + bn2 + residual add + relu fused in the shifted-window epilogue.
    return conv_s1_wide(out, p["conv2"], relu=True, residual=identity)


def resnet18_features(p, x):
    x = conv_im2col(x, p["stem"], stride=2, pad=3, relu=True)
    x = maxpool_3x3_s2_p1(x)
    for layer in ("layer1", "layer2", "layer3", "layer4"):
        for blk in p[layer]:
            x = basic_block(x, blk)
    return jnp.mean(x.astype(jnp.float32), axis=(1, 2))   # avgpool + flatten


# ----------------------------------------------------------------------------
# SHN forward
# ----------------------------------------------------------------------------
def shn_forward(params, x, _unused):
    x = jnp.squeeze(x, axis=1)                           # (B, 1, H, W) NCHW
    x = jnp.transpose(x, (0, 2, 3, 1)).astype(jnp.bfloat16)   # NHWC bf16
    feat = resnet18_features(params["resnet"], x)        # (B, 512)
    return transformer_fc(params["transformer"], feat)   # (B, num_classes)


# ----------------------------------------------------------------------------
# Deterministic *prepared* parameter init: BN folded, pre-transposed,
# bf16 weights.  Shapes mirror the PyTorch module.
# ----------------------------------------------------------------------------
def _conv_bn_prepared(key, cin, cout, kh, kw, stride, eps=1e-5):
    std = (2.0 / (cin * kh * kw)) ** 0.5
    w = jax.random.normal(key, (kh, kw, cin, cout), jnp.float32) * std
    gamma = jnp.ones((cout,), jnp.float32)
    beta = jnp.zeros((cout,), jnp.float32)
    mean = jnp.zeros((cout,), jnp.float32)
    var = jnp.ones((cout,), jnp.float32)
    scale = gamma / jnp.sqrt(var + eps)
    shift = beta - mean * scale
    wf = w * scale[None, None, None, :]

    d = {"kh": kh, "kw": kw,
         "b": shift.reshape(1, cout).astype(jnp.float32)}
    if stride == 1 and kh == 3:
        # shifted-window kernel form: (kh*kw, Cin, Cout)
        d["w3"] = wf.reshape(kh * kw, cin, cout).astype(jnp.bfloat16)
    else:
        # im2col form: (K, Cout), K rounded up to a sublane multiple only.
        K = kh * kw * cin
        Kp = _round_up(K, 8)
        wm = wf.reshape(K, cout)
        if Kp != K:
            wm = jnp.pad(wm, ((0, Kp - K), (0, 0)))
        d["w"] = wm.astype(jnp.bfloat16)
    return d


def _basic_block_prepared(key, cin, cout, stride):
    k1, k2, k3 = jax.random.split(key, 3)
    d = {"stride": stride,
         "conv1": _conv_bn_prepared(k1, cin, cout, 3, 3, stride),
         "conv2": _conv_bn_prepared(k2, cout, cout, 3, 3, 1)}
    if stride != 1 or cin != cout:
        d["down"] = _conv_bn_prepared(k3, cin, cout, 1, 1, stride)
    return d


def init_resnet18_params(key):
    ks = jax.random.split(key, 9)
    p = {"stem": _conv_bn_prepared(ks[0], 1, 64, 7, 7, 2)}
    p["layer1"] = [_basic_block_prepared(ks[1], 64, 64, 1),
                   _basic_block_prepared(ks[2], 64, 64, 1)]
    p["layer2"] = [_basic_block_prepared(ks[3], 64, 128, 2),
                   _basic_block_prepared(ks[4], 128, 128, 1)]
    p["layer3"] = [_basic_block_prepared(ks[5], 128, 256, 2),
                   _basic_block_prepared(ks[6], 256, 256, 1)]
    p["layer4"] = [_basic_block_prepared(ks[7], 256, 512, 2),
                   _basic_block_prepared(ks[8], 512, 512, 1)]
    return p


def init_transformer_fc_params(key, E=512, ff=2048, nlayers=2, num_classes=1):
    keys = jax.random.split(key, nlayers + 1)

    def lin(k, out_f, in_f):
        std = (1.0 / in_f) ** 0.5
        return (jax.random.normal(k, (out_f, in_f), jnp.float32) * std,
                jnp.zeros((out_f,), jnp.float32))

    layers = []
    packed = []
    for l in range(nlayers):
        ks = jax.random.split(keys[l], 4)
        in_w, in_b = lin(ks[0], 3 * E, E)
        out_w, out_b = lin(ks[1], E, E)
        w1, b1 = lin(ks[2], ff, E)
        w2, b2 = lin(ks[3], E, ff)
        # S == 1: only the V slice of in_proj is ever needed (softmax == 1).
        layers.append({
            "wv": in_w[2 * E:3 * E].T.astype(jnp.bfloat16),
            "wo": out_w.T.astype(jnp.bfloat16),
            "w1": w1.T.astype(jnp.bfloat16),
            "w2": w2.T.astype(jnp.bfloat16),
        })
        packed += [in_b[2 * E:3 * E], out_b, b1, b2,
                   jnp.ones((E,), jnp.float32), jnp.zeros((E,), jnp.float32),
                   jnp.ones((E,), jnp.float32), jnp.zeros((E,), jnp.float32)]

    fc_w, fc_b = lin(keys[nlayers], num_classes, E)
    npad = _round_up(num_classes, 128)          # lane-dense head output
    wfc = jnp.zeros((E, npad), jnp.float32).at[:, :num_classes].set(fc_w.T)
    bfc = jnp.zeros((npad,), jnp.float32).at[:num_classes].set(fc_b)
    packed.append(bfc)

    return {"layers": layers,
            "wfc": wfc.astype(jnp.bfloat16),
            "packed": jnp.concatenate(packed).reshape(1, -1).astype(jnp.float32),
            "ff": ff,
            "num_classes": num_classes}


if __name__ == "__main__":
    key = jax.random.PRNGKey(0)
    k_in, k_res, k_tr = jax.random.split(key, 3)

    B, H, W = 2, 32, 32
    num_classes = 1
    d_model = 512

    # Input matches PyTorch forward: x.squeeze(1) must yield a (B,1,H,W) image.
    x = jax.random.normal(k_in, (B, 1, 1, H, W), jnp.float32)

    params = {
        "resnet": init_resnet18_params(k_res),
        "transformer": init_transformer_fc_params(
            k_tr, E=d_model, ff=2048, nlayers=2, num_classes=num_classes),
    }

    out = shn_forward(params, x, None)
    out = jax.block_until_ready(out)
    assert out.shape == (B, num_classes), out.shape
    assert bool(jnp.all(jnp.isfinite(out)))
    print("KERNEL_OK")
</pallas_src>

<mosaic_0001>
module attributes {stable_mosaic.version = 11 : i64} {
  func.func @_mm_kernel(%arg0: i32, %arg1: i32, %arg2: memref<256x56xbf16, #tpu.memory_space<vmem>>, %arg3: memref<56x64xbf16, #tpu.memory_space<vmem>>, %arg4: memref<1x64xf32, #tpu.memory_space<vmem>>, %arg5: memref<256x64xbf16, #tpu.memory_space<vmem>>) attributes {dimension_semantics = [#tpu.dimension_semantics<parallel>, #tpu.dimension_semantics<parallel>], iteration_bounds = array<i64: 2, 1>, scalar_prefetch = 0 : i64, scratch_operands = 0 : i64, tpu.core_type = #tpu.core_type<tc>, window_params = [{transform_indices = @transform_0, window_bounds = array<i64: 256, 56>}, {transform_indices = @transform_1, window_bounds = array<i64: 56, 64>}, {transform_indices = @transform_2, window_bounds = array<i64: 1, 64>}, {transform_indices = @transform_3, window_bounds = array<i64: 256, 64>}]} {
    %c0 = arith.constant 0 : index
    %c0_0 = arith.constant 0 : index
    %0 = vector.load %arg2[%c0, %c0_0] : memref<256x56xbf16, #tpu.memory_space<vmem>>, vector<256x56xbf16>
    %c0_1 = arith.constant 0 : index
    %c0_2 = arith.constant 0 : index
    %1 = vector.load %arg3[%c0_1, %c0_2] : memref<56x64xbf16, #tpu.memory_space<vmem>>, vector<56x64xbf16>
    %cst = arith.constant dense<0.000000e+00> : vector<256x64xf32>
    %2 = tpu.matmul %0, %1, %cst {dimension_numbers = #tpu.dot_dimension_numbers<[1], [0], [0], [1], [0, 0, 1, 1], [], []>} : vector<256x56xbf16>, vector<56x64xbf16>, vector<256x64xf32> -> vector<256x64xf32>
    %c0_3 = arith.constant 0 : index
    %c0_4 = arith.constant 0 : index
    %3 = vector.load %arg4[%c0_3, %c0_4] : memref<1x64xf32, #tpu.memory_space<vmem>>, vector<1x64xf32>
    %4 = vector.broadcast %3 : vector<1x64xf32> to vector<256x64xf32>
    %5 = arith.addf %2, %4 : vector<256x64xf32>
    %cst_5 = arith.constant 0.000000e+00 : f32
    %6 = vector.broadcast %cst_5 : f32 to vector<256x64xf32>
    %7 = arith.maximumf %5, %6 : vector<256x64xf32>
    %8 = arith.truncf %7 : vector<256x64xf32> to vector<256x64xbf16>
    %c0_6 = arith.constant 0 : index
    %c0_7 = arith.constant 0 : index
    %9 = vector.load %arg5[%c0_6, %c0_7] : memref<256x64xbf16, #tpu.memory_space<vmem>>, vector<256x64xbf16>
    tpu.vector_store %arg5[%c0_6, %c0_7], %8 {strides = array<i32>} : memref<256x64xbf16, #tpu.memory_space<vmem>>, vector<256x64xbf16>,
    return
  }
  func.func @transform_0(%arg0: i32, %arg1: i32) -> (i32, i32) {
    %c0_i32 = arith.constant 0 : i32
    %c0_i32_0 = arith.constant 0 : i32
    return %arg0, %c0_i32 : i32, i32
  }
  func.func @transform_1(%arg0: i32, %arg1: i32) -> (i32, i32) {
    %c0_i32 = arith.constant 0 : i32
    %c0_i32_0 = arith.constant 0 : i32
    return %c0_i32, %arg1 : i32, i32
  }
  func.func @transform_2(%arg0: i32, %arg1: i32) -> (i32, i32) {
    %c0_i32 = arith.constant 0 : i32
    %c0_i32_0 = arith.constant 0 : i32
    return %c0_i32, %arg1 : i32, i32
  }
  func.func @transform_3(%arg0: i32, %arg1: i32) -> (i32, i32) {
    %c0_i32 = arith.constant 0 : i32
    return %arg0, %arg1 : i32, i32
  }
}

</mosaic_0001>

<llo_original>
// kernel: tpu_custom_call.1
$region0: #{tpu_custom_call.1}
  #allocation0 [shape = 'u32[]', space=smem, size = 0x4, offset = 0x4, fixed_abs, tag = 'smem constant byte address 0x4 - core index']
  #allocation1 [shape = 'u32[144,128]{1,0:T(1,128)}', space=vmem, size = 0x12000, scoped, tag = 'internal scratch']
  %s0 = inlined_call_operand.vmem [shape: bf16[512,56], index: 0, kind: input, shape index: {}]
  %s1 = inlined_call_operand.vmem [shape: bf16[56,64], index: 1, kind: input, shape index: {}]
  %s2 = inlined_call_operand.vmem [shape: f32[1,64], index: 2, kind: input, shape index: {}]
  %s3 = inlined_call_operand.vmem [shape: bf16[512,64], index: 3, kind: output, shape index: {}]
  %s4 = sld [smem:[#allocation0]]
  $region45: #{tpu_custom_call.1} parent=0
    _
  %s6 = ssub.s32 1, %s4
  %s7 = scalar_select 0, %s6, %s4
  loop: start=0, step=1, limit=4
  $region2: #{tpu_custom_call.1} parent=0 // loop_pre_header
    _
  $region3: #{tpu_custom_call.1} parent=0 // loop_header
    %s9 = sphi 0, %s13
    %p10 = scmp.ge.s32.totalorder %s9, 4
    %s16 = sphi 0, %s28
    %s17 = sphi 0, %s24
    %s18 = sphi 0, %s16
    %s19 = sphi 0, %s17
    %s20 = sphi 0, %s18
    %s21 = sphi 0, %s19
    %s31 = sphi 0, %s33
    %s34 = sphi 0, %s31
    %s35 = sphi 0, %s34
    %s51 = sphi 0, %s35
    %s57 = sphi 0, %s59
    %s60 = sphi 0, %s57
    %s61 = sphi 0, %s60
    %s77 = sphi 0, %s61
    %s83 = sphi 0, %s85
    %s86 = sphi 0, %s83
    %s87 = sphi 0, %s86
    %s103 = sphi 0, %s87
    %s111 = sphi 0, %s113
    %s114 = sphi 0, %s111
    %s115 = sphi 0, %s114
    %s131 = sphi 0, %s115
  $region4: #{tpu_custom_call.1} parent=0 // loop_header_branch
    %12 = sbr.rel (%p10) target = $region8
  $region5: #{tpu_custom_call.1} parent=0 // loop_body
    %s14 = ssub.s32 %s9, 1
    %s15 = ssub.s32 %s9, 2
    %s22 = sadd.s32 1, %s17
    %p23 = scmp.ge.s32.totalorder %s22, 1
    %s24 = scalar_select %p23, 0, %s22
    %s25 = sadd.s32 1, %s16
    %s26 = scalar_select %p23, %s25, %s16
    %p27 = scmp.ge.s32.totalorder %s26, 2
    %s28 = scalar_select %p27, 0, %s26
    %s29 = ssub.s32 %s16, %s28
    %p30 = scmp.eq.s32.totalorder %s29, 0
    %s32 = sadd.s32 %s31, 1
    %s33 = scalar_select %p30, %s31, %s32
    %p36 = pneg %p30
    %p37 = scmp.eq.s32.totalorder %s9, 1
    %p38 = por %p36, %p37
    %p39 = scmp.ne.s32.totalorder %s31, %s34
    %p40 = scmp.eq.s32.totalorder %s9, 0
    %p41 = por %p39, %p40
    %p42 = scmp.ne.s32.totalorder %s31, %s34
    %p43 = scmp.eq.s32.totalorder %s14, 1
    %p44 = por %p42, %p43
    %p45 = scmp.ne.s32.totalorder %s34, %s35
    %p46 = scmp.eq.s32.totalorder %s14, 0
    %p47 = por %p45, %p46
    %p48 = scmp.ne.s32.totalorder %s34, %s35
    %p49 = scmp.eq.s32.totalorder %s15, 1
    %p50 = por %p48, %p49
    %p52 = scmp.ne.s32.totalorder %s35, %s51
    %p53 = scmp.eq.s32.totalorder %s15, 0
    %p54 = por %p52, %p53
    %s55 = ssub.s32 %s17, %s24
    %p56 = scmp.eq.s32.totalorder %s55, 0
    %s58 = sadd.s32 %s57, 1
    %s59 = scalar_select %p56, %s57, %s58
    %p62 = pneg %p56
    %p63 = scmp.eq.s32.totalorder %s9, 1
    %p64 = por %p62, %p63
    %p65 = scmp.ne.s32.totalorder %s57, %s60
    %p66 = scmp.eq.s32.totalorder %s9, 0
    %p67 = por %p65, %p66
    %p68 = scmp.ne.s32.totalorder %s57, %s60
    %p69 = scmp.eq.s32.totalorder %s14, 1
    %p70 = por %p68, %p69
    %p71 = scmp.ne.s32.totalorder %s60, %s61
    %p72 = scmp.eq.s32.totalorder %s14, 0
    %p73 = por %p71, %p72
    %p74 = scmp.ne.s32.totalorder %s60, %s61
    %p75 = scmp.eq.s32.totalorder %s15, 1
    %p76 = por %p74, %p75
    %p78 = scmp.ne.s32.totalorder %s61, %s77
    %p79 = scmp.eq.s32.totalorder %s15, 0
    %p80 = por %p78, %p79
    %s81 = ssub.s32 %s17, %s24
    %p82 = scmp.eq.s32.totalorder %s81, 0
    %s84 = sadd.s32 %s83, 1
    %s85 = scalar_select %p82, %s83, %s84
    %p88 = pneg %p82
    %p89 = scmp.eq.s32.totalorder %s9, 1
    %p90 = por %p88, %p89
    %p91 = scmp.ne.s32.totalorder %s83, %s86
    %p92 = scmp.eq.s32.totalorder %s9, 0
    %p93 = por %p91, %p92
    %p94 = scmp.ne.s32.totalorder %s83, %s86
    %p95 = scmp.eq.s32.totalorder %s14, 1
    %p96 = por %p94, %p95
    %p97 = scmp.ne.s32.totalorder %s86, %s87
    %p98 = scmp.eq.s32.totalorder %s14, 0
    %p99 = por %p97, %p98
    %p100 = scmp.ne.s32.totalorder %s86, %s87
    %p101 = scmp.eq.s32.totalorder %s15, 1
    %p102 = por %p100, %p101
    %p104 = scmp.ne.s32.totalorder %s87, %s103
    %p105 = scmp.eq.s32.totalorder %s15, 0
    %p106 = por %p104, %p105
    %s107 = ssub.s32 %s16, %s28
    %s108 = ssub.s32 %s17, %s24
    %s109 = sor.u32 %s107, %s108
    %p110 = scmp.eq.s32.totalorder %s109, 0
    %s112 = sadd.s32 %s111, 1
    %s113 = scalar_select %p110, %s111, %s112
    %p116 = pneg %p110
    %p117 = scmp.eq.s32.totalorder %s9, 1
    %p118 = por %p116, %p117
    %p119 = scmp.ne.s32.totalorder %s111, %s114
    %p120 = scmp.eq.s32.totalorder %s9, 0
    %p121 = por %p119, %p120
    %p122 = scmp.ne.s32.totalorder %s111, %s114
    %p123 = scmp.eq.s32.totalorder %s14, 1
    %p124 = por %p122, %p123
    %p125 = scmp.ne.s32.totalorder %s114, %s115
    %p126 = scmp.eq.s32.totalorder %s14, 0
    %p127 = por %p125, %p126
    %p128 = scmp.ne.s32.totalorder %s114, %s115
    %p129 = scmp.eq.s32.totalorder %s15, 1
    %p130 = por %p128, %p129
    %p132 = scmp.ne.s32.totalorder %s115, %s131
    %p133 = scmp.eq.s32.totalorder %s15, 0
    %p134 = por %p132, %p133
    %p135 = scmp.le.s32.totalorder 1, %s9
    %p136 = scmp.lt.s32.totalorder %s9, 3
    %p137 = pnand %p135, %p136
    %p138 = pneg %p137
    // Predicated region
    $region9: #{tpu_custom_call.1} parent=5 // pred_check
      _
    $region10: #{tpu_custom_call.1} parent=5 // pred_check_branch
      %140 = sbr.rel (%p137) target = $region12
    $region11: #{tpu_custom_call.1} parent=5 // pred_region
      %s141 = ssub.s32 %s9, 1
      // Predicated region
      $region13: #{tpu_custom_call.1} parent=11 // pred_check
        %p142 = pneg %p73
      $region14: #{tpu_custom_call.1} parent=11 // pred_check_branch
        %144 = sbr.rel (%p142) target = $region16
      $region15: #{tpu_custom_call.1} parent=11 // pred_region
        %p145 = scmp.lt.s32.totalorder %s19, 0
        %s146 = scalar_select %p145, %s19, 0
        %s147 = smul.addr %s146, 4
        %s148 = scalar_lea.vmem %s1, %s147
      $region16: #{tpu_custom_call.1} parent=11 // pred_fallthru
        _
      // Predicated region
      $region17: #{tpu_custom_call.1} parent=11 // pred_check
        %p149 = pneg %p99
      $region18: #{tpu_custom_call.1} parent=11 // pred_check_branch
        %151 = sbr.rel (%p149) target = $region20
      $region19: #{tpu_custom_call.1} parent=11 // pred_region
        %p152 = scmp.lt.s32.totalorder %s19, 0
        %s153 = scalar_select %p152, %s19, 0
        %s154 = scalar_lea.vmem %s2, %s153
      $region20: #{tpu_custom_call.1} parent=11 // pred_fallthru
        _
    $region12: #{tpu_custom_call.1} parent=5 // pred_fallthru
      _
    %p155 = scmp.lt.s32.totalorder %s9, 2
    // Predicated region
    $region21: #{tpu_custom_call.1} parent=5 // pred_check
      %p156 = pneg %p155
    $region22: #{tpu_custom_call.1} parent=5 // pred_check_branch
      %158 = sbr.rel (%p156) target = $region24
    $region23: #{tpu_custom_call.1} parent=5 // pred_region
      // Predicated region
      $region25: #{tpu_custom_call.1} parent=23 // pred_check
        %p159 = pneg %p41
      $region26: #{tpu_custom_call.1} parent=23 // pred_check_branch
        %161 = sbr.rel (%p159) target = $region28
      $region27: #{tpu_custom_call.1} parent=23 // pred_region
        %s162 = smul.u32 32, %s16
        %p163 = scmp.lt.s32.totalorder %s162, 63
        %s164 = scalar_select %p163, %s162, 63
        %s165 = smul.addr %s164, 4
        %s166 = scalar_lea.vmem %s0, %s165
        %s167 = smul.u32 32, %s16
      $region28: #{tpu_custom_call.1} parent=23 // pred_fallthru
        _
    $region24: #{tpu_custom_call.1} parent=5 // pred_fallthru
      _
    %p168 = scmp.le.s32.totalorder 1, %s9
    %p169 = scmp.lt.s32.totalorder %s9, 3
    %p170 = pnand %p168, %p169
    %p171 = pneg %p170
    // Predicated region
    $region29: #{tpu_custom_call.1} parent=5 // pred_check
      _
    $region30: #{tpu_custom_call.1} parent=5 // pred_check_branch
      %173 = sbr.rel (%p170) target = $region32
    $region31: #{tpu_custom_call.1} parent=5 // pred_region
      %s174 = ssub.s32 %s9, 1
      %s175 = smul.u32 32, %s18
      %p176 = scmp.lt.s32.totalorder %s175, 63
      %s177 = scalar_select %p176, %s175, 63
      %s178 = smul.addr %s177, 4
      %s179 = scalar_lea.vmem %s0, %s178
      %p180 = pneg %p47
      %p181 = pneg %p44
      %p182 = scmp.lt.s32.totalorder %s19, 0
      %s183 = scalar_select %p182, %s19, 0
      %s184 = smul.addr %s183, 4
      %s185 = scalar_lea.vmem %s1, %s184
      %p186 = pneg %p73
      %p187 = pneg %p70
      %p188 = scmp.lt.s32.totalorder %s19, 0
      %s189 = scalar_select %p188, %s19, 0
      %s190 = scalar_lea.vmem %s2, %s189
      %p191 = pneg %p99
      %p192 = pneg %p96
      %p193 = pneg %p127
      %p194 = pneg %p124
      %s195 = smul.u32 32, %s18
      %p196 = scmp.lt.s32.totalorder %s195, 63
      %s197 = scalar_select %p196, %s195, 63
      %p198 = scmp.lt.s32.totalorder %s19, 0
      %s199 = scalar_select %p198, %s19, 0
      %s200 = sadd.s32 %s199, %s197
      %s201 = smul.addr %s200, 4
      %s202 = scalar_lea.vmem %s3, %s201
      %s203 = smul.u32 32, %s18
      %p204 = scmp.lt.s32.totalorder %s203, 63
      %s205 = scalar_select %p204, %s203, 63
      %s206 = smul.addr %s205, 4
      %s207 = scalar_lea.vmem %s0, %s206
      %s208 = smul.u32 32, %s18
      %p209 = scmp.lt.s32.totalorder %s19, 0
      %s210 = scalar_select %p209, %s19, 0
      %s211 = smul.addr %s210, 4
      %s212 = scalar_lea.vmem %s1, %s211
      %p213 = scmp.lt.s32.totalorder %s19, 0
      %s214 = scalar_select %p213, %s19, 0
      %s215 = scalar_lea.vmem %s2, %s214
      %s216 = smul.u32 32, %s18
      %p217 = scmp.lt.s32.totalorder %s216, 63
      %s218 = scalar_select %p217, %s216, 63
      %p219 = scmp.lt.s32.totalorder %s19, 0
      %s220 = scalar_select %p219, %s19, 0
      %s221 = sadd.s32 %s220, %s218
      %s222 = smul.addr %s221, 4
      %s223 = scalar_lea.vmem %s3, %s222
      %s224 = smul.u32 32, %s18
      %v226 = vld [vmem:[%s207] sm:$0xf]
      %v227 = vld [vmem:[%s207 + $0x4] sm:$0xf]
      %v228 = vld [vmem:[%s207 + $0x8] sm:$0xf]
      %v229 = vld [vmem:[%s207 + $0xc] sm:$0xf]
      %v230 = vld [vmem:[%s207 + $0x10] sm:$0xf]
      %v231 = vld [vmem:[%s207 + $0x14] sm:$0xf]
      %v232 = vld [vmem:[%s207 + $0x18] sm:$0xf]
      %v233 = vld [vmem:[%s207 + $0x1c] sm:$0xf]
      %v234 = vld [vmem:[%s207 + $0x20] sm:$0xf]
      %v235 = vld [vmem:[%s207 + $0x24] sm:$0xf]
      %v236 = vld [vmem:[%s207 + $0x28] sm:$0xf]
      %v237 = vld [vmem:[%s207 + $0x2c] sm:$0xf]
      %v238 = vld [vmem:[%s207 + $0x30] sm:$0xf]
      %v239 = vld [vmem:[%s207 + $0x34] sm:$0xf]
      %v240 = vld [vmem:[%s207 + $0x38] sm:$0xf]
      %v241 = vld [vmem:[%s207 + $0x3c] sm:$0xf]
      %v242 = vld [vmem:[%s207 + $0x40] sm:$0xf]
      %v243 = vld [vmem:[%s207 + $0x44] sm:$0xf]
      %v244 = vld [vmem:[%s207 + $0x48] sm:$0xf]
      %v245 = vld [vmem:[%s207 + $0x4c] sm:$0xf]
      %v246 = vld [vmem:[%s207 + $0x50] sm:$0xf]
      %v247 = vld [vmem:[%s207 + $0x54] sm:$0xf]
      %v248 = vld [vmem:[%s207 + $0x58] sm:$0xf]
      %v249 = vld [vmem:[%s207 + $0x5c] sm:$0xf]
      %v250 = vld [vmem:[%s207 + $0x60] sm:$0xf]
      %v251 = vld [vmem:[%s207 + $0x64] sm:$0xf]
      %v252 = vld [vmem:[%s207 + $0x68] sm:$0xf]
      %v253 = vld [vmem:[%s207 + $0x6c] sm:$0xf]
      %v254 = vld [vmem:[%s207 + $0x70] sm:$0xf]
      %v255 = vld [vmem:[%s207 + $0x74] sm:$0xf]
      %v256 = vld [vmem:[%s207 + $0x78] sm:$0xf]
      %v257 = vld [vmem:[%s207 + $0x7c] sm:$0xf]
      %v258 = vld [vmem:[%s212] sm:$0xf]
      %v259 = vld [vmem:[%s212 + $0x4] sm:$0xf]
      %v260 = vld [vmem:[%s212 + $0x8] sm:$0xf]
      %v261 = vld [vmem:[%s212 + $0xc] sm:$0xf]
      %v262 = vld [vmem:[%s212 + $0x10] sm:$0xf]
      %v263 = vld [vmem:[%s212 + $0x14] sm:$0xf]
      %v264 = vld [vmem:[%s212 + $0x18] sm:$0xf]
      %v265 = vld [vmem:[%s215] sm:$0x1]
      %v267 = vlaneseq
      %v268 = vshrl.u32 %v267, 7
      %v269 = vsub.s32 0, %v268
      %v270 = vrot.slane %v265, %v269
      %v304 = vunpack.c.l.b16 %v226
      %v305 = vunpack.c.l.b16 %v227
      %v306 = vunpack.c.l.b16 %v228
      %v307 = vunpack.c.l.b16 %v229
      %v308 = vunpack.c.l.b16 %v230
      %v309 = vunpack.c.l.b16 %v231
      %v310 = vunpack.c.l.b16 %v232
      %v311 = vunpack.c.l.b16 %v233
      %v312 = vunpack.c.l.b16 %v234
      %v313 = vunpack.c.l.b16 %v235
      %v314 = vunpack.c.l.b16 %v236
      %v315 = vunpack.c.l.b16 %v237
      %v316 = vunpack.c.l.b16 %v238
      %v317 = vunpack.c.l.b16 %v239
      %v318 = vunpack.c.l.b16 %v240
      %v319 = vunpack.c.l.b16 %v241
      %v320 = vunpack.c.l.b16 %v242
      %v321 = vunpack.c.l.b16 %v243
      %v322 = vunpack.c.l.b16 %v244
      %v323 = vunpack.c.l.b16 %v245
      %v324 = vunpack.c.l.b16 %v246
      %v325 = vunpack.c.l.b16 %v247
      %v326 = vunpack.c.l.b16 %v248
      %v327 = vunpack.c.l.b16 %v249
      %v328 = vunpack.c.l.b16 %v250
      %v329 = vunpack.c.l.b16 %v251
      %v330 = vunpack.c.l.b16 %v252
      %v331 = vunpack.c.l.b16 %v253
      %v332 = vunpack.c.l.b16 %v254
      %v333 = vunpack.c.l.b16 %v255
      %v334 = vunpack.c.l.b16 %v256
      %v335 = vunpack.c.l.b16 %v257
      %v336 = vpack.c.b16 %v305, %v304
      %v337 = vpack.c.b16 %v307, %v306
      %v338 = vpack.c.b16 %v309, %v308
      %v339 = vpack.c.b16 %v311, %v310
      %v340 = vpack.c.b16 %v313, %v312
      %v341 = vpack.c.b16 %v315, %v314
      %v342 = vpack.c.b16 %v317, %v316
      %v343 = vpack.c.b16 %v319, %v318
      %v344 = vpack.c.b16 %v321, %v320
      %v345 = vpack.c.b16 %v323, %v322
      %v346 = vpack.c.b16 %v325, %v324
      %v347 = vpack.c.b16 %v327, %v326
      %v348 = vpack.c.b16 %v329, %v328
      %v349 = vpack.c.b16 %v331, %v330
      %v350 = vpack.c.b16 %v333, %v332
      %v351 = vpack.c.b16 %v335, %v334
      %v359 = vunpack.c.l.b16 %v258
      %v360 = vunpack.c.l.b16 %v259
      %v361 = vunpack.c.l.b16 %v260
      %v362 = vunpack.c.l.b16 %v261
      %v363 = vunpack.c.l.b16 %v262
      %v364 = vunpack.c.l.b16 %v263
      %v365 = vunpack.c.l.b16 %v264
      %v366 = vpack.c.b16 %v360, %v359
      %v367 = vpack.c.b16 %v362, %v361
      %v368 = vpack.c.b16 %v364, %v363
      %v369 = vpack.c.b16 %v365, %v365
      %vm373 = vcmask 457728
      %v375 = vsel %vm373, %v336, 0
      %v378 = vsel %vm373, %v337, 0
      %v381 = vsel %vm373, %v338, 0
      %v384 = vsel %vm373, %v339, 0
      %v387 = vsel %vm373, %v340, 0
      %v390 = vsel %vm373, %v341, 0
      %v393 = vsel %vm373, %v342, 0
      %v396 = vsel %vm373, %v343, 0
      %v399 = vsel %vm373, %v344, 0
      %v402 = vsel %vm373, %v345, 0
      %v405 = vsel %vm373, %v346, 0
      %v408 = vsel %vm373, %v347, 0
      %v411 = vsel %vm373, %v348, 0
      %v414 = vsel %vm373, %v349, 0
      %v417 = vsel %vm373, %v350, 0
      %v420 = vsel %vm373, %v351, 0
      %vm422 = vcmask 1043456
      %v424 = vsel %vm422, %v369, 0
      %426 = vmatprep.subr.bf16.mxu0 0
      %427 = vmatpush1.bf16.msra.mxu0 %v366
      %428 = vmatprep.subr.bf16.mxu0 0
      %429 = vmatpush1.bf16.msra.mxu0 %v367
      %430 = vmatprep.subr.bf16.mxu0 0
      %431 = vmatpush1.bf16.msra.mxu0 %v368
      %432 = vmatprep.subr.bf16.mxu0 0
      %433 = vmatpush1.bf16.msra.mxu0 %v424
      %434 = vmatprep.subr.bf16.mxu0 0
      %435 = vmatpush1.bf16.msra.mxu0 0
      %436 = vmatprep.subr.bf16.mxu0 0
      %437 = vmatpush1.bf16.msra.mxu0 0
      %438 = vmatprep.subr.bf16.mxu0 0
      %439 = vmatpush1.bf16.msra.mxu0 0
      %440 = vmatprep.subr.bf16.mxu0 0
      %441 = vmatpush1.bf16.msra.mxu0 0
      %442 = vmatprep.subr.bf16.mxu0 0
      %443 = vmatpush1.bf16.msra.mxu0 0
      %444 = vmatprep.subr.bf16.mxu0 0
      %445 = vmatpush1.bf16.msra.mxu0 0
      %446 = vmatprep.subr.bf16.mxu0 0
      %447 = vmatpush1.bf16.msra.mxu0 0
      %448 = vmatprep.subr.bf16.mxu0 0
      %449 = vmatpush1.bf16.msra.mxu0 0
      %450 = vmatprep.subr.bf16.mxu0 0
      %451 = vmatpush1.bf16.msra.mxu0 0
      %452 = vmatprep.subr.bf16.mxu0 0
      %453 = vmatpush1.bf16.msra.mxu0 0
      %454 = vmatprep.subr.bf16.mxu0 0
      %455 = vmatpush1.bf16.msra.mxu0 0
      %456 = vmatprep.subr.bf16.mxu0 0
      %457 = vmatpush1.bf16.msra.mxu0 0
      %458 = vmatprep.mubr.bf16.mxu0 0
      %459 = vmatmul.mubr.bf16.gmra.mrb[0].mxu0 %v375
      %v460 = vpop.f32.mrb[0].mxu0
      %v461 = vadd.f32 %v270, %v460
      %v462 = vpop.f32.mrb[0].mxu0
      %v463 = vpop.f32.mrb[0].mxu0
      %v464 = vadd.f32 %v270, %v463
      %v465 = vpop.f32.mrb[0].mxu0
      %466 = vmatprep.mubr.bf16.mxu0 0
      %467 = vmatmul.mubr.bf16.gmra.mrb[0].mxu0 %v378
      %v468 = vpop.f32.mrb[0].mxu0
      %v469 = vadd.f32 %v270, %v468
      %v470 = vpop.f32.mrb[0].mxu0
      %v471 = vpop.f32.mrb[0].mxu0
      %v472 = vadd.f32 %v270, %v471
      %v473 = vpop.f32.mrb[0].mxu0
      %474 = vmatprep.mubr.bf16.mxu0 0
      %475 = vmatmul.mubr.bf16.gmra.mrb[0].mxu0 %v381
      %v476 = vpop.f32.mrb[0].mxu0
      %v477 = vadd.f32 %v270, %v476
      %v478 = vpop.f32.mrb[0].mxu0
      %v479 = vpop.f32.mrb[0].mxu0
      %v480 = vadd.f32 %v270, %v479
      %v481 = vpop.f32.mrb[0].mxu0
      %482 = vmatprep.mubr.bf16.mxu0 0
      %483 = vmatmul.mubr.bf16.gmra.mrb[0].mxu0 %v384
      %v484 = vpop.f32.mrb[0].mxu0
      %v485 = vadd.f32 %v270, %v484
      %v486 = vpop.f32.mrb[0].mxu0
      %v487 = vpop.f32.mrb[0].mxu0
      %v488 = vadd.f32 %v270, %v487
      %v489 = vpop.f32.mrb[0].mxu0
      %490 = vmatprep.mubr.bf16.mxu0 0
      %491 = vmatmul.mubr.bf16.gmra.mrb[0].mxu0 %v387
      %v492 = vpop.f32.mrb[0].mxu0
      %v493 = vadd.f32 %v270, %v492
      %v494 = vpop.f32.mrb[0].mxu0
      %v495 = vpop.f32.mrb[0].mxu0
      %v496 = vadd.f32 %v270, %v495
      %v497 = vpop.f32.mrb[0].mxu0
      %498 = vmatprep.mubr.bf16.mxu0 0
      %499 = vmatmul.mubr.bf16.gmra.mrb[0].mxu0 %v390
      %v500 = vpop.f32.mrb[0].mxu0
      %v501 = vadd.f32 %v270, %v500
      %v502 = vpop.f32.mrb[0].mxu0
      %v503 = vpop.f32.mrb[0].mxu0
      %v504 = vadd.f32 %v270, %v503
      %v505 = vpop.f32.mrb[0].mxu0
      %506 = vmatprep.mubr.bf16.mxu0 0
      %507 = vmatmul.mubr.bf16.gmra.mrb[0].mxu0 %v393
      %v508 = vpop.f32.mrb[0].mxu0
      %v509 = vadd.f32 %v270, %v508
      %v510 = vpop.f32.mrb[0].mxu0
      %v511 = vpop.f32.mrb[0].mxu0
      %v512 = vadd.f32 %v270, %v511
      %v513 = vpop.f32.mrb[0].mxu0
      %514 = vmatprep.mubr.bf16.mxu0 0
      %515 = vmatmul.mubr.bf16.gmra.mrb[0].mxu0 %v396
      %v516 = vpop.f32.mrb[0].mxu0
      %v517 = vadd.f32 %v270, %v516
      %v518 = vpop.f32.mrb[0].mxu0
      %v519 = vpop.f32.mrb[0].mxu0
      %v520 = vadd.f32 %v270, %v519
      %v521 = vpop.f32.mrb[0].mxu0
      %522 = vmatprep.mubr.bf16.mxu0 0
      %523 = vmatmul.mubr.bf16.gmra.mrb[0].mxu0 %v399
      %v524 = vpop.f32.mrb[0].mxu0
      %v525 = vadd.f32 %v270, %v524
      %v526 = vpop.f32.mrb[0].mxu0
      %v527 = vpop.f32.mrb[0].mxu0
      %v528 = vadd.f32 %v270, %v527
      %v529 = vpop.f32.mrb[0].mxu0
      %530 = vmatprep.mubr.bf16.mxu0 0
      %531 = vmatmul.mubr.bf16.gmra.mrb[0].mxu0 %v402
      %v532 = vpop.f32.mrb[0].mxu0
      %v533 = vadd.f32 %v270, %v532
      %v534 = vpop.f32.mrb[0].mxu0
      %v535 = vpop.f32.mrb[0].mxu0
      %v536 = vadd.f32 %v270, %v535
      %v537 = vpop.f32.mrb[0].mxu0
      %538 = vmatprep.mubr.bf16.mxu0 0
      %539 = vmatmul.mubr.bf16.gmra.mrb[0].mxu0 %v405
      %v540 = vpop.f32.mrb[0].mxu0
      %v541 = vadd.f32 %v270, %v540
      %v542 = vpop.f32.mrb[0].mxu0
      %v543 = vpop.f32.mrb[0].mxu0
      %v544 = vadd.f32 %v270, %v543
      %v545 = vpop.f32.mrb[0].mxu0
      %546 = vmatprep.mubr.bf16.mxu0 0
      %547 = vmatmul.mubr.bf16.gmra.mrb[0].mxu0 %v408
      %v548 = vpop.f32.mrb[0].mxu0
      %v549 = vadd.f32 %v270, %v548
      %v550 = vpop.f32.mrb[0].mxu0
      %v551 = vpop.f32.mrb[0].mxu0
      %v552 = vadd.f32 %v270, %v551
      %v553 = vpop.f32.mrb[0].mxu0
      %554 = vmatprep.mubr.bf16.mxu0 0
      %555 = vmatmul.mubr.bf16.gmra.mrb[0].mxu0 %v411
      %v556 = vpop.f32.mrb[0].mxu0
      %v557 = vadd.f32 %v270, %v556
      %v558 = vpop.f32.mrb[0].mxu0
      %v559 = vpop.f32.mrb[0].mxu0
      %v560 = vadd.f32 %v270, %v559
      %v561 = vpop.f32.mrb[0].mxu0
      %562 = vmatprep.mubr.bf16.mxu0 0
      %563 = vmatmul.mubr.bf16.gmra.mrb[0].mxu0 %v414
      %v564 = vpop.f32.mrb[0].mxu0
      %v565 = vadd.f32 %v270, %v564
      %v566 = vpop.f32.mrb[0].mxu0
      %v567 = vpop.f32.mrb[0].mxu0
      %v568 = vadd.f32 %v270, %v567
      %v569 = vpop.f32.mrb[0].mxu0
      %570 = vmatprep.mubr.bf16.mxu0 0
      %571 = vmatmul.mubr.bf16.gmra.mrb[0].mxu0 %v417
      %v572 = vpop.f32.mrb[0].mxu0
      %v573 = vadd.f32 %v270, %v572
      %v574 = vpop.f32.mrb[0].mxu0
      %v575 = vpop.f32.mrb[0].mxu0
      %v576 = vadd.f32 %v270, %v575
      %v577 = vpop.f32.mrb[0].mxu0
      %578 = vmatprep.mubr.bf16.mxu0 0
      %579 = vmatmul.mubr.bf16.gmra.mrb[0].mxu0 %v420
      %v580 = vpop.f32.mrb[0].mxu0
      %v581 = vadd.f32 %v270, %v580
      %v582 = vpop.f32.mrb[0].mxu0
      %v583 = vpop.f32.mrb[0].mxu0
      %v584 = vadd.f32 %v270, %v583
      %v585 = vpop.f32.mrb[0].mxu0
      %586 = vdwg.mxu0
      %v587 = vmax.f32 %v461, 0.0
      %v588 = vmax.f32 %v464, 0.0
      %v589 = vmax.f32 %v469, 0.0
      %v590 = vmax.f32 %v472, 0.0
      %v591 = vmax.f32 %v477, 0.0
      %v592 = vmax.f32 %v480, 0.0
      %v593 = vmax.f32 %v485, 0.0
      %v594 = vmax.f32 %v488, 0.0
      %v595 = vmax.f32 %v493, 0.0
      %v596 = vmax.f32 %v496, 0.0
      %v597 = vmax.f32 %v501, 0.0
      %v598 = vmax.f32 %v504, 0.0
      %v599 = vmax.f32 %v509, 0.0
      %v600 = vmax.f32 %v512, 0.0
      %v601 = vmax.f32 %v517, 0.0
      %v602 = vmax.f32 %v520, 0.0
      %v603 = vmax.f32 %v525, 0.0
      %v604 = vmax.f32 %v528, 0.0
      %v605 = vmax.f32 %v533, 0.0
      %v606 = vmax.f32 %v536, 0.0
      %v607 = vmax.f32 %v541, 0.0
      %v608 = vmax.f32 %v544, 0.0
      %v609 = vmax.f32 %v549, 0.0
      %v610 = vmax.f32 %v552, 0.0
      %v611 = vmax.f32 %v557, 0.0
      %v612 = vmax.f32 %v560, 0.0
      %v613 = vmax.f32 %v565, 0.0
      %v614 = vmax.f32 %v568, 0.0
      %v615 = vmax.f32 %v573, 0.0
      %v616 = vmax.f32 %v576, 0.0
      %v617 = vmax.f32 %v581, 0.0
      %v618 = vmax.f32 %v584, 0.0
      %v619 = vpack.c.bf16 %v588, %v587
      %v620 = vpack.c.bf16 %v590, %v589
      %v621 = vpack.c.bf16 %v592, %v591
      %v622 = vpack.c.bf16 %v594, %v593
      %v623 = vpack.c.bf16 %v596, %v595
      %v624 = vpack.c.bf16 %v598, %v597
      %v625 = vpack.c.bf16 %v600, %v599
      %v626 = vpack.c.bf16 %v602, %v601
      %v627 = vpack.c.bf16 %v604, %v603
      %v628 = vpack.c.bf16 %v606, %v605
      %v629 = vpack.c.bf16 %v608, %v607
      %v630 = vpack.c.bf16 %v610, %v609
      %v631 = vpack.c.bf16 %v612, %v611
      %v632 = vpack.c.bf16 %v614, %v613
      %v633 = vpack.c.bf16 %v616, %v615
      %v634 = vpack.c.bf16 %v618, %v617
      %v651 = vunpack.c.l.b16 %v619
      %v652 = vunpack.c.h.b16 %v619
      %v653 = vunpack.c.l.b16 %v620
      %v654 = vunpack.c.h.b16 %v620
      %v655 = vunpack.c.l.b16 %v621
      %v656 = vunpack.c.h.b16 %v621
      %v657 = vunpack.c.l.b16 %v622
      %v658 = vunpack.c.h.b16 %v622
      %v659 = vunpack.c.l.b16 %v623
      %v660 = vunpack.c.h.b16 %v623
      %v661 = vunpack.c.l.b16 %v624
      %v662 = vunpack.c.h.b16 %v624
      %v663 = vunpack.c.l.b16 %v625
      %v664 = vunpack.c.h.b16 %v625
      %v665 = vunpack.c.l.b16 %v626
      %v666 = vunpack.c.h.b16 %v626
      %v667 = vunpack.c.l.b16 %v627
      %v668 = vunpack.c.h.b16 %v627
      %v669 = vunpack.c.l.b16 %v628
      %v670 = vunpack.c.h.b16 %v628
      %v671 = vunpack.c.l.b16 %v629
      %v672 = vunpack.c.h.b16 %v629
      %v673 = vunpack.c.l.b16 %v630
      %v674 = vunpack.c.h.b16 %v630
      %v675 = vunpack.c.l.b16 %v631
      %v676 = vunpack.c.h.b16 %v631
      %v677 = vunpack.c.l.b16 %v632
      %v678 = vunpack.c.h.b16 %v632
      %v679 = vunpack.c.l.b16 %v633
      %v680 = vunpack.c.h.b16 %v633
      %v681 = vunpack.c.l.b16 %v634
      %v682 = vunpack.c.h.b16 %v634
      %v683 = vpack.c.b16 %v651, %v651
      %v684 = vpack.c.b16 %v652, %v652
      %v685 = vpack.c.b16 %v653, %v653
      %v686 = vpack.c.b16 %v654, %v654
      %v687 = vpack.c.b16 %v655, %v655
      %v688 = vpack.c.b16 %v656, %v656
      %v689 = vpack.c.b16 %v657, %v657
      %v690 = vpack.c.b16 %v658, %v658
      %v691 = vpack.c.b16 %v659, %v659
      %v692 = vpack.c.b16 %v660, %v660
      %v693 = vpack.c.b16 %v661, %v661
      %v694 = vpack.c.b16 %v662, %v662
      %v695 = vpack.c.b16 %v663, %v663
      %v696 = vpack.c.b16 %v664, %v664
      %v697 = vpack.c.b16 %v665, %v665
      %v698 = vpack.c.b16 %v666, %v666
      %v699 = vpack.c.b16 %v667, %v667
      %v700 = vpack.c.b16 %v668, %v668
      %v701 = vpack.c.b16 %v669, %v669
      %v702 = vpack.c.b16 %v670, %v670
      %v703 = vpack.c.b16 %v671, %v671
      %v704 = vpack.c.b16 %v672, %v672
      %v705 = vpack.c.b16 %v673, %v673
      %v706 = vpack.c.b16 %v674, %v674
      %v707 = vpack.c.b16 %v675, %v675
      %v708 = vpack.c.b16 %v676, %v676
      %v709 = vpack.c.b16 %v677, %v677
      %v710 = vpack.c.b16 %v678, %v678
      %v711 = vpack.c.b16 %v679, %v679
      %v712 = vpack.c.b16 %v680, %v680
      %v713 = vpack.c.b16 %v681, %v681
      %v714 = vpack.c.b16 %v682, %v682
      %vm747 = vcmask 519168
      %748 = vst.msk [vmem:[%s223] sm:$0xf] %vm747, %v683
      %749 = vst.msk [vmem:[%s223 + $0x4] sm:$0xf] %vm747, %v684
      %750 = vst.msk [vmem:[%s223 + $0x8] sm:$0xf] %vm747, %v685
      %751 = vst.msk [vmem:[%s223 + $0xc] sm:$0xf] %vm747, %v686
      %752 = vst.msk [vmem:[%s223 + $0x10] sm:$0xf] %vm747, %v687
      %753 = vst.msk [vmem:[%s223 + $0x14] sm:$0xf] %vm747, %v688
      %754 = vst.msk [vmem:[%s223 + $0x18] sm:$0xf] %vm747, %v689
      %755 = vst.msk [vmem:[%s223 + $0x1c] sm:$0xf] %vm747, %v690
      %756 = vst.msk [vmem:[%s223 + $0x20] sm:$0xf] %vm747, %v691
      %757 = vst.msk [vmem:[%s223 + $0x24] sm:$0xf] %vm747, %v692
      %758 = vst.msk [vmem:[%s223 + $0x28] sm:$0xf] %vm747, %v693
      %759 = vst.msk [vmem:[%s223 + $0x2c] sm:$0xf] %vm747, %v694
      %760 = vst.msk [vmem:[%s223 + $0x30] sm:$0xf] %vm747, %v695
      %761 = vst.msk [vmem:[%s223 + $0x34] sm:$0xf] %vm747, %v696
      %762 = vst.msk [vmem:[%s223 + $0x38] sm:$0xf] %vm747, %v697
      %763 = vst.msk [vmem:[%s223 + $0x3c] sm:$0xf] %vm747, %v698
      %764 = vst.msk [vmem:[%s223 + $0x40] sm:$0xf] %vm747, %v699
      %765 = vst.msk [vmem:[%s223 + $0x44] sm:$0xf] %vm747, %v700
      %766 = vst.msk [vmem:[%s223 + $0x48] sm:$0xf] %vm747, %v701
      %767 = vst.msk [vmem:[%s223 + $0x4c] sm:$0xf] %vm747, %v702
      %768 = vst.msk [vmem:[%s223 + $0x50] sm:$0xf] %vm747, %v703
      %769 = vst.msk [vmem:[%s223 + $0x54] sm:$0xf] %vm747, %v704
      %770 = vst.msk [vmem:[%s223 + $0x58] sm:$0xf] %vm747, %v705
      %771 = vst.msk [vmem:[%s223 + $0x5c] sm:$0xf] %vm747, %v706
      %772 = vst.msk [vmem:[%s223 + $0x60] sm:$0xf] %vm747, %v707
      %773 = vst.msk [vmem:[%s223 + $0x64] sm:$0xf] %vm747, %v708
      %774 = vst.msk [vmem:[%s223 + $0x68] sm:$0xf] %vm747, %v709
      %775 = vst.msk [vmem:[%s223 + $0x6c] sm:$0xf] %vm747, %v710
      %776 = vst.msk [vmem:[%s223 + $0x70] sm:$0xf] %vm747, %v711
      %777 = vst.msk [vmem:[%s223 + $0x74] sm:$0xf] %vm747, %v712
      %778 = vst.msk [vmem:[%s223 + $0x78] sm:$0xf] %vm747, %v713
      %779 = vst.msk [vmem:[%s223 + $0x7c] sm:$0xf] %vm747, %v714
      %s780 = smul.u32 32, %s18
      %p781 = scmp.lt.s32.totalorder %s780, 63
      %s782 = scalar_select %p781, %s780, 63
      %p783 = scmp.lt.s32.totalorder %s19, 0
      %s784 = scalar_select %p783, %s19, 0
      %s785 = sadd.s32 %s784, %s782
      %s786 = smul.addr %s785, 4
      %s787 = scalar_lea.vmem %s3, %s786
      // Predicated region
      $region33: #{tpu_custom_call.1} parent=31 // pred_check
        %p788 = pneg %p124
      $region34: #{tpu_custom_call.1} parent=31 // pred_check_branch
        %790 = sbr.rel (%p788) target = $region36
      $region35: #{tpu_custom_call.1} parent=31 // pred_region
        %s791 = smul.u32 32, %s18
      $region36: #{tpu_custom_call.1} parent=31 // pred_fallthru
        _
    $region32: #{tpu_custom_call.1} parent=5 // pred_fallthru
      _
    %p792 = scmp.le.s32.totalorder 2, %s9
    // Predicated region
    $region37: #{tpu_custom_call.1} parent=5 // pred_check
      %p793 = pneg %p792
    $region38: #{tpu_custom_call.1} parent=5 // pred_check_branch
      %795 = sbr.rel (%p793) target = $region40
    $region39: #{tpu_custom_call.1} parent=5 // pred_region
      %s796 = ssub.s32 %s9, 2
      // Predicated region
      $region41: #{tpu_custom_call.1} parent=39 // pred_check
        %p797 = pneg %p130
      $region42: #{tpu_custom_call.1} parent=39 // pred_check_branch
        %799 = sbr.rel (%p797) target = $region44
      $region43: #{tpu_custom_call.1} parent=39 // pred_region
        %s800 = smul.u32 32, %s20
        %p801 = scmp.lt.s32.totalorder %s800, 63
        %s802 = scalar_select %p801, %s800, 63
        %p803 = scmp.lt.s32.totalorder %s21, 0
        %s804 = scalar_select %p803, %s21, 0
        %s805 = sadd.s32 %s804, %s802
        %s806 = smul.addr %s805, 4
        %s807 = scalar_lea.vmem %s3, %s806
      $region44: #{tpu_custom_call.1} parent=39 // pred_fallthru
        _
    $region40: #{tpu_custom_call.1} parent=5 // pred_fallthru
      _
  $region6: #{tpu_custom_call.1} parent=0 // loop_footer
    %s13 = sadd.s32 1, %s9
  $region7: #{tpu_custom_call.1} parent=0 // loop_footer_branch
    %8 = sbr.rel target = $region3
  $region8: #{tpu_custom_call.1} parent=0 // loop_exit
    _

</llo_original>
